<compile_context>
chip_gen: v7x
topology: tpu7x:2x2x1
jax: 0.10.0
libtpu: 0.0.40
codegen_flags: <defaults>
</compile_context>

<pallas_src>
import functools
import math

import jax
import jax.numpy as jnp
from jax import lax
from jax.experimental import pallas as pl
from jax.experimental.pallas import tpu as pltpu

_NEG = -1e30      # large finite negative (avoids -inf arithmetic / NaN corners)
_LANES = 128      # lane width for the lane-replicated m/l scratch


def _round_up(x, m):
    return ((x + m - 1) // m) * m


def _flash_attention_kernel(q_ref, k_ref, v_ref, o_ref,
                            qs_ref, m_ref, l_ref, acc_ref, *,
                            scale, mask_flag, kv_valid_in_last,
                            num_kv, num_heads, head_dim_v):
    """One (batch, q-tile, kv-tile) grid step over all heads.

    q_ref: (1, H, tq, E)   k_ref: (1, H, tk, E)   v_ref: (1, H, tk, Dv)
    o_ref: (1, tq, H*Dv)   qs_ref: (H, tq, E) pre-scaled q in the MXU dtype
    m_ref/l_ref: (H, tq, 128) f32 lane-replicated    acc_ref: (H, tq, Dv) f32
    """
    qi = pl.program_id(1)
    ki = pl.program_id(2)

    @pl.when(ki == 0)
    def _init():
        m_ref[...] = jnp.full_like(m_ref, -jnp.inf)
        l_ref[...] = jnp.zeros_like(l_ref)
        acc_ref[...] = jnp.zeros_like(acc_ref)
        # Hoist the softmax scale: scale q once per q tile (not per kv step)
        # and keep it in the MXU input dtype.
        qs_ref[...] = (q_ref[0].astype(jnp.float32)
                       * jnp.float32(scale)).astype(qs_ref.dtype)

    def _tile(apply_causal, apply_pad):
        q = qs_ref[...]                      # (H, tq, E)   mm dtype
        k = k_ref[0]                         # (H, tk, E)
        v = v_ref[0]                         # (H, tk, Dv)
        tq, tk = q.shape[1], k.shape[1]

        # scores = q @ k^T per head, contracting E (no transposed K copy).
        s = lax.dot_general(q, k, (((2,), (2,)), ((0,), (0,))),
                            preferred_element_type=jnp.float32)   # (H, tq, tk)

        if apply_causal or apply_pad:
            row = lax.broadcasted_iota(jnp.int32, (tq, tk), 0)
            col = lax.broadcasted_iota(jnp.int32, (tq, tk), 1)
            mask = None
            if apply_causal:
                mask = col > row
            if apply_pad:
                pad = col >= kv_valid_in_last
                mask = pad if mask is None else (mask | pad)
            s = jnp.where(mask[None, :, :], jnp.float32(_NEG), s)

        m_prev = m_ref[...]                                     # (H, tq, 128)
        l_prev = l_ref[...]
        row_max = jnp.max(s, axis=-1, keepdims=True)            # (H, tq, 1)
        m_new = jnp.maximum(m_prev, row_max)                    # (H, tq, 128)
        alpha = jnp.exp(m_prev - m_new)                         # (H, tq, 128)
        p = jnp.exp(s - m_new[..., 0:1])                        # (H, tq, tk)
        l_ref[...] = alpha * l_prev + jnp.sum(p, axis=-1, keepdims=True)
        m_ref[...] = m_new
        pv = lax.dot_general(p.astype(v.dtype), v,
                             (((2,), (1,)), ((0,), (0,))),
                             preferred_element_type=jnp.float32)  # (H, tq, Dv)
        acc_ref[...] = alpha[..., 0:1] * acc_ref[...] + pv

    if mask_flag:
        # Interior tiles need no mask at all; only the diagonal tile masks.
        # Padded kv columns live in the last tile only, where col > row already
        # covers them for every valid row, so no separate pad mask is needed.
        pl.when(ki < qi)(lambda: _tile(False, False))
        pl.when(ki == qi)(lambda: _tile(True, False))
        # ki > qi: fully masked tile -> skipped entirely (index_map is clamped).
    else:
        if kv_valid_in_last is None:
            _tile(False, False)
        else:
            pl.when(ki < num_kv - 1)(lambda: _tile(False, False))
            pl.when(ki == num_kv - 1)(lambda: _tile(False, True))

    @pl.when(ki == num_kv - 1)
    def _finalize():
        inv_l = pl.reciprocal(l_ref[...][..., 0:1], approx=True)   # (H, tq, 1)
        out = (acc_ref[...] * inv_l).astype(o_ref.dtype)           # (H, tq, Dv)
        # Lane-dense output: head h occupies lanes [h*Dv, (h+1)*Dv).
        for h in range(num_heads):
            o_ref[0, :, h * head_dim_v:(h + 1) * head_dim_v] = out[h]


def full_attention(queries, keys, values, *, scale=None, mask_flag=True,
                   block_q=512, block_k=512, mm_dtype=jnp.bfloat16):
    """Pallas implementation of FullAttention.forward (eval mode, no dropout).

    queries: (B, L, H, E), keys: (B, S, H, E), values: (B, S, H, D)
    Returns (V, None), matching output_attention=False.
    mm_dtype: dtype fed to the MXU (bf16 default, None = input dtype);
              softmax math and accumulation always stay f32.
    """
    B, L, H, E = queries.shape
    _, S, _, D = values.shape
    scale = scale if scale is not None else 1.0 / math.sqrt(E)
    if mask_flag and L != S:
        raise ValueError("TriangularCausalMask requires L == S")

    out_dtype = queries.dtype
    in_dtype = queries.dtype if mm_dtype is None else mm_dtype

    # (B, L, H, E) -> (B, H, L, E); cast MXU operands once here (halves Q/K/V
    # HBM bytes for bf16). One fused XLA transpose+cast per tensor.
    q = jnp.transpose(queries, (0, 2, 1, 3)).astype(in_dtype)
    k = jnp.transpose(keys, (0, 2, 1, 3)).astype(in_dtype)
    v = jnp.transpose(values, (0, 2, 1, 3)).astype(in_dtype)

    # Tile sizes: sublane-aligned, full extent for short sequences, square for
    # the causal diagonal-tile logic.
    tq = min(block_q, _round_up(L, 8))
    tk = min(block_k, _round_up(S, 8))
    if mask_flag:
        tq = tk = min(min(block_q, block_k), _round_up(L, 8))

    Lp = _round_up(L, tq)
    Sp = _round_up(S, tk)
    if Lp != L:
        q = jnp.pad(q, ((0, 0), (0, 0), (0, Lp - L), (0, 0)))
    if Sp != S:
        k = jnp.pad(k, ((0, 0), (0, 0), (0, Sp - S), (0, 0)))
        v = jnp.pad(v, ((0, 0), (0, 0), (0, Sp - S), (0, 0)))

    num_q = Lp // tq
    num_kv = Sp // tk
    kv_valid_in_last = None if Sp == S else S - (num_kv - 1) * tk

    if mask_flag:
        # Clamp the kv block index for skipped (ki > qi) tiles: same block as
        # the previous step -> Pallas issues no new DMA.
        kv_index = lambda b, i, j: (b, 0, jnp.minimum(j, i), 0)
    else:
        kv_index = lambda b, i, j: (b, 0, j, 0)

    kernel = functools.partial(
        _flash_attention_kernel,
        scale=scale, mask_flag=mask_flag, kv_valid_in_last=kv_valid_in_last,
        num_kv=num_kv, num_heads=H, head_dim_v=D)

    out = pl.pallas_call(
        kernel,
        out_shape=jax.ShapeDtypeStruct((B, Lp, H * D), out_dtype),
        grid_spec=pltpu.PrefetchScalarGridSpec(
            num_scalar_prefetch=0,
            grid=(B, num_q, num_kv),
            in_specs=[
                pl.BlockSpec((1, H, tq, E), lambda b, i, j: (b, 0, i, 0)),
                pl.BlockSpec((1, H, tk, E), kv_index),
                pl.BlockSpec((1, H, tk, D), kv_index),
            ],
            out_specs=pl.BlockSpec((1, tq, H * D), lambda b, i, j: (b, i, 0)),
            scratch_shapes=[
                pltpu.VMEM((H, tq, E), in_dtype),           # pre-scaled q
                pltpu.VMEM((H, tq, _LANES), jnp.float32),   # m (running max)
                pltpu.VMEM((H, tq, _LANES), jnp.float32),   # l (running denom)
                pltpu.VMEM((H, tq, D), jnp.float32),        # acc
            ],
        ),
        compiler_params=pltpu.CompilerParams(
            dimension_semantics=("parallel", "parallel", "arbitrary"),
            vmem_limit_bytes=32 * 1024 * 1024,
        ),
    )(q, k, v)

    # (B, Lp, H*D) -> (B, L, H, D): trim padding, split heads (no transpose).
    V = out[:, :L, :].reshape(B, L, H, D)
    return V, None


def _reference(queries, keys, values, *, scale=None, mask_flag=True):
    B, L, H, E = queries.shape
    scale = scale if scale is not None else 1.0 / math.sqrt(E)
    scores = jnp.einsum('blhe,bshe->bhls', queries, keys)
    if mask_flag:
        S = keys.shape[1]
        mask = jnp.triu(jnp.ones((L, S), dtype=bool), k=1)
        scores = jnp.where(mask[None, None], -jnp.inf, scores)
    A = jax.nn.softmax(scale * scores, axis=-1)
    V = jnp.einsum('bhls,bshd->blhd', A, values)
    return V


if __name__ == "__main__":
    master = jax.random.PRNGKey(0)

    def run_case(B, L, S, H, E, D, mask_flag, key, *, block_q=512, block_k=512,
                 mm_dtype=jnp.bfloat16, atol=3e-2, rtol=3e-2):
        kq, kk, kv = jax.random.split(key, 3)
        queries = jax.random.normal(kq, (B, L, H, E), dtype=jnp.float32)
        keys = jax.random.normal(kk, (B, S, H, E), dtype=jnp.float32)
        values = jax.random.normal(kv, (B, S, H, D), dtype=jnp.float32)

        V, A = full_attention(queries, keys, values, mask_flag=mask_flag,
                              block_q=block_q, block_k=block_k,
                              mm_dtype=mm_dtype)
        V = jax.block_until_ready(V)

        V_ref = _reference(queries, keys, values, mask_flag=mask_flag)
        assert V.shape == (B, L, H, D)
        assert A is None
        err = float(jnp.max(jnp.abs(V - V_ref)))
        assert jnp.allclose(V, V_ref, atol=atol, rtol=rtol), (
            f"mismatch vs reference (mask_flag={mask_flag}, L={L}, S={S}, "
            f"max abs err={err:.3e})")

    k1, k2, k3, k4 = jax.random.split(master, 4)
    # small causal self-attention (single tile, bf16 MXU path)
    run_case(2, 8, 8, 2, 32, 32, True, k1)
    # non-causal cross-attention with key padding (L=9 -> 16, S=20 -> 24)
    run_case(2, 9, 20, 2, 32, 32, False, k2)
    # multi-tile causal: tile skipping + clamped kv DMA + q/kv padding (3x64)
    run_case(1, 136, 136, 2, 32, 32, True, k3, block_q=64, block_k=64)
    # f32 MXU path, multi-tile causal with padding (160 -> 2 x 128 tiles)
    run_case(1, 160, 160, 4, 32, 32, True, k4, block_q=128, block_k=128,
             mm_dtype=None, atol=5e-3, rtol=5e-3)

    print("KERNEL_OK")
</pallas_src>

<mosaic_0001>
module attributes {stable_mosaic.version = 11 : i64} {
  func.func @_flash_attention_kernel(%arg0: i32, %arg1: i32, %arg2: i32, %arg3: memref<1x2x8x32xbf16, #tpu.memory_space<vmem>>, %arg4: memref<1x2x8x32xbf16, #tpu.memory_space<vmem>>, %arg5: memref<1x2x8x32xbf16, #tpu.memory_space<vmem>>, %arg6: memref<1x8x64xf32, #tpu.memory_space<vmem>>, %arg7: memref<2x8x32xbf16, #tpu.memory_space<vmem>>, %arg8: memref<2x8x128xf32, #tpu.memory_space<vmem>>, %arg9: memref<2x8x128xf32, #tpu.memory_space<vmem>>, %arg10: memref<2x8x32xf32, #tpu.memory_space<vmem>>) attributes {dimension_semantics = [#tpu.dimension_semantics<parallel>, #tpu.dimension_semantics<parallel>, #tpu.dimension_semantics<arbitrary>], iteration_bounds = array<i64: 2, 1, 1>, scalar_prefetch = 0 : i64, scratch_operands = 4 : i64, tpu.core_type = #tpu.core_type<tc>, window_params = [{transform_indices = @transform_0, window_bounds = array<i64: 1, 2, 8, 32>}, {transform_indices = @transform_1, window_bounds = array<i64: 1, 2, 8, 32>}, {transform_indices = @transform_2, window_bounds = array<i64: 1, 2, 8, 32>}, {transform_indices = @transform_3, window_bounds = array<i64: 1, 8, 64>}]} {
    %c0_i32 = arith.constant 0 : i32
    %0 = arith.cmpi eq, %arg2, %c0_i32 : i32
    %1 = arith.extui %0 : i1 to i32
    %c0_i32_0 = arith.constant 0 : i32
    %2 = arith.cmpi ne, %1, %c0_i32_0 : i32
    scf.if %2 {
      %cst = arith.constant 0xFF800000 : f32
      %12 = vector.broadcast %cst : f32 to vector<2x8x128xf32>
      %c0 = arith.constant 0 : index
      %c0_5 = arith.constant 0 : index
      %c0_6 = arith.constant 0 : index
      %13 = vector.load %arg8[%c0, %c0_5, %c0_6] : memref<2x8x128xf32, #tpu.memory_space<vmem>>, vector<2x8x128xf32>
      tpu.vector_store %arg8[%c0, %c0_5, %c0_6], %12 {strides = array<i32>} : memref<2x8x128xf32, #tpu.memory_space<vmem>>, vector<2x8x128xf32>,
      %cst_7 = arith.constant 0.000000e+00 : f32
      %14 = vector.broadcast %cst_7 : f32 to vector<2x8x128xf32>
      %c0_8 = arith.constant 0 : index
      %c0_9 = arith.constant 0 : index
      %c0_10 = arith.constant 0 : index
      %15 = vector.load %arg9[%c0_8, %c0_9, %c0_10] : memref<2x8x128xf32, #tpu.memory_space<vmem>>, vector<2x8x128xf32>
      tpu.vector_store %arg9[%c0_8, %c0_9, %c0_10], %14 {strides = array<i32>} : memref<2x8x128xf32, #tpu.memory_space<vmem>>, vector<2x8x128xf32>,
      %cst_11 = arith.constant 0.000000e+00 : f32
      %16 = vector.broadcast %cst_11 : f32 to vector<2x8x32xf32>
      %c0_12 = arith.constant 0 : index
      %c0_13 = arith.constant 0 : index
      %c0_14 = arith.constant 0 : index
      %17 = vector.load %arg10[%c0_12, %c0_13, %c0_14] : memref<2x8x32xf32, #tpu.memory_space<vmem>>, vector<2x8x32xf32>
      tpu.vector_store %arg10[%c0_12, %c0_13, %c0_14], %16 {strides = array<i32>} : memref<2x8x32xf32, #tpu.memory_space<vmem>>, vector<2x8x32xf32>,
      %c0_15 = arith.constant 0 : index
      %c0_16 = arith.constant 0 : index
      %c0_17 = arith.constant 0 : index
      %c0_18 = arith.constant 0 : index
      %18 = vector.load %arg3[%c0_15, %c0_16, %c0_17, %c0_18] : memref<1x2x8x32xbf16, #tpu.memory_space<vmem>>, vector<1x2x8x32xbf16>
      %19 = vector.shape_cast %18 : vector<1x2x8x32xbf16> to vector<2x8x32xbf16>
      %20 = arith.extf %19 : vector<2x8x32xbf16> to vector<2x8x32xf32>
      %cst_19 = arith.constant 0.176776692 : f32
      %21 = vector.broadcast %cst_19 : f32 to vector<2x8x32xf32>
      %22 = arith.mulf %20, %21 : vector<2x8x32xf32>
      %23 = arith.truncf %22 : vector<2x8x32xf32> to vector<2x8x32xbf16>
      %c0_20 = arith.constant 0 : index
      %c0_21 = arith.constant 0 : index
      %c0_22 = arith.constant 0 : index
      %24 = vector.load %arg7[%c0_20, %c0_21, %c0_22] : memref<2x8x32xbf16, #tpu.memory_space<vmem>>, vector<2x8x32xbf16>
      tpu.vector_store %arg7[%c0_20, %c0_21, %c0_22], %23 {strides = array<i32>} : memref<2x8x32xbf16, #tpu.memory_space<vmem>>, vector<2x8x32xbf16>,
    } else {
    }
    %3 = arith.cmpi slt, %arg2, %arg1 : i32
    %4 = arith.extui %3 : i1 to i32
    %c0_i32_1 = arith.constant 0 : i32
    %5 = arith.cmpi ne, %4, %c0_i32_1 : i32
    scf.if %5 {
      %c0 = arith.constant 0 : index
      %c0_5 = arith.constant 0 : index
      %c0_6 = arith.constant 0 : index
      %12 = vector.load %arg7[%c0, %c0_5, %c0_6] : memref<2x8x32xbf16, #tpu.memory_space<vmem>>, vector<2x8x32xbf16>
      %c0_7 = arith.constant 0 : index
      %c0_8 = arith.constant 0 : index
      %c0_9 = arith.constant 0 : index
      %c0_10 = arith.constant 0 : index
      %13 = vector.load %arg4[%c0_7, %c0_8, %c0_9, %c0_10] : memref<1x2x8x32xbf16, #tpu.memory_space<vmem>>, vector<1x2x8x32xbf16>
      %14 = vector.shape_cast %13 : vector<1x2x8x32xbf16> to vector<2x8x32xbf16>
      %c0_11 = arith.constant 0 : index
      %c0_12 = arith.constant 0 : index
      %c0_13 = arith.constant 0 : index
      %c0_14 = arith.constant 0 : index
      %15 = vector.load %arg5[%c0_11, %c0_12, %c0_13, %c0_14] : memref<1x2x8x32xbf16, #tpu.memory_space<vmem>>, vector<1x2x8x32xbf16>
      %16 = vector.shape_cast %15 : vector<1x2x8x32xbf16> to vector<2x8x32xbf16>
      %cst = arith.constant dense<0.000000e+00> : vector<2x8x8xf32>
      %17 = tpu.matmul %12, %14, %cst {dimension_numbers = #tpu.dot_dimension_numbers<[2], [2], [1], [1], [0, 0, 0, 1, 1, 1], [0], [0]>} : vector<2x8x32xbf16>, vector<2x8x32xbf16>, vector<2x8x8xf32> -> vector<2x8x8xf32>
      %c0_15 = arith.constant 0 : index
      %c0_16 = arith.constant 0 : index
      %c0_17 = arith.constant 0 : index
      %18 = vector.load %arg8[%c0_15, %c0_16, %c0_17] : memref<2x8x128xf32, #tpu.memory_space<vmem>>, vector<2x8x128xf32>
      %c0_18 = arith.constant 0 : index
      %c0_19 = arith.constant 0 : index
      %c0_20 = arith.constant 0 : index
      %19 = vector.load %arg9[%c0_18, %c0_19, %c0_20] : memref<2x8x128xf32, #tpu.memory_space<vmem>>, vector<2x8x128xf32>
      %cst_21 = arith.constant dense<0xFF800000> : vector<2x8xf32>
      %20 = vector.multi_reduction <maximumf>, %17, %cst_21 [2] : vector<2x8x8xf32> to vector<2x8xf32>
      %21 = vector.shape_cast %20 : vector<2x8xf32> to vector<2x8x1xf32>
      %22 = vector.broadcast %21 : vector<2x8x1xf32> to vector<2x8x128xf32>
      %23 = arith.maximumf %18, %22 : vector<2x8x128xf32>
      %24 = arith.subf %18, %23 : vector<2x8x128xf32>
      %25 = math.exp %24 : vector<2x8x128xf32>
      %26 = vector.extract_strided_slice %23 {offsets = [0, 0, 0], sizes = [2, 8, 1], strides = [1, 1, 1]} : vector<2x8x128xf32> to vector<2x8x1xf32>
      %27 = vector.broadcast %26 : vector<2x8x1xf32> to vector<2x8x8xf32>
      %28 = arith.subf %17, %27 : vector<2x8x8xf32>
      %29 = math.exp %28 : vector<2x8x8xf32>
      %30 = arith.mulf %25, %19 : vector<2x8x128xf32>
      %cst_22 = arith.constant dense<0.000000e+00> : vector<2x8xf32>
      %31 = vector.multi_reduction <add>, %29, %cst_22 [2] : vector<2x8x8xf32> to vector<2x8xf32>
      %32 = vector.shape_cast %31 : vector<2x8xf32> to vector<2x8x1xf32>
      %33 = vector.broadcast %32 : vector<2x8x1xf32> to vector<2x8x128xf32>
      %34 = arith.addf %30, %33 : vector<2x8x128xf32>
      %c0_23 = arith.constant 0 : index
      %c0_24 = arith.constant 0 : index
      %c0_25 = arith.constant 0 : index
      %35 = vector.load %arg9[%c0_23, %c0_24, %c0_25] : memref<2x8x128xf32, #tpu.memory_space<vmem>>, vector<2x8x128xf32>
      tpu.vector_store %arg9[%c0_23, %c0_24, %c0_25], %34 {strides = array<i32>} : memref<2x8x128xf32, #tpu.memory_space<vmem>>, vector<2x8x128xf32>,
      %c0_26 = arith.constant 0 : index
      %c0_27 = arith.constant 0 : index
      %c0_28 = arith.constant 0 : index
      %36 = vector.load %arg8[%c0_26, %c0_27, %c0_28] : memref<2x8x128xf32, #tpu.memory_space<vmem>>, vector<2x8x128xf32>
      tpu.vector_store %arg8[%c0_26, %c0_27, %c0_28], %23 {strides = array<i32>} : memref<2x8x128xf32, #tpu.memory_space<vmem>>, vector<2x8x128xf32>,
      %37 = arith.truncf %29 : vector<2x8x8xf32> to vector<2x8x8xbf16>
      %cst_29 = arith.constant dense<0.000000e+00> : vector<2x8x32xf32>
      %38 = tpu.matmul %37, %16, %cst_29 {dimension_numbers = #tpu.dot_dimension_numbers<[2], [1], [1], [2], [0, 0, 0, 1, 1, 2], [0], [0]>} : vector<2x8x8xbf16>, vector<2x8x32xbf16>, vector<2x8x32xf32> -> vector<2x8x32xf32>
      %39 = vector.extract_strided_slice %25 {offsets = [0, 0, 0], sizes = [2, 8, 1], strides = [1, 1, 1]} : vector<2x8x128xf32> to vector<2x8x1xf32>
      %c0_30 = arith.constant 0 : index
      %c0_31 = arith.constant 0 : index
      %c0_32 = arith.constant 0 : index
      %40 = vector.load %arg10[%c0_30, %c0_31, %c0_32] : memref<2x8x32xf32, #tpu.memory_space<vmem>>, vector<2x8x32xf32>
      %41 = vector.broadcast %39 : vector<2x8x1xf32> to vector<2x8x32xf32>
      %42 = arith.mulf %41, %40 : vector<2x8x32xf32>
      %43 = arith.addf %42, %38 : vector<2x8x32xf32>
      %c0_33 = arith.constant 0 : index
      %c0_34 = arith.constant 0 : index
      %c0_35 = arith.constant 0 : index
      %44 = vector.load %arg10[%c0_33, %c0_34, %c0_35] : memref<2x8x32xf32, #tpu.memory_space<vmem>>, vector<2x8x32xf32>
      tpu.vector_store %arg10[%c0_33, %c0_34, %c0_35], %43 {strides = array<i32>} : memref<2x8x32xf32, #tpu.memory_space<vmem>>, vector<2x8x32xf32>,
    } else {
    }
    %6 = arith.cmpi eq, %arg2, %arg1 : i32
    %7 = arith.extui %6 : i1 to i32
    %c0_i32_2 = arith.constant 0 : i32
    %8 = arith.cmpi ne, %7, %c0_i32_2 : i32
    scf.if %8 {
      %c0 = arith.constant 0 : index
      %c0_5 = arith.constant 0 : index
      %c0_6 = arith.constant 0 : index
      %12 = vector.load %arg7[%c0, %c0_5, %c0_6] : memref<2x8x32xbf16, #tpu.memory_space<vmem>>, vector<2x8x32xbf16>
      %c0_7 = arith.constant 0 : index
      %c0_8 = arith.constant 0 : index
      %c0_9 = arith.constant 0 : index
      %c0_10 = arith.constant 0 : index
      %13 = vector.load %arg4[%c0_7, %c0_8, %c0_9, %c0_10] : memref<1x2x8x32xbf16, #tpu.memory_space<vmem>>, vector<1x2x8x32xbf16>
      %14 = vector.shape_cast %13 : vector<1x2x8x32xbf16> to vector<2x8x32xbf16>
      %c0_11 = arith.constant 0 : index
      %c0_12 = arith.constant 0 : index
      %c0_13 = arith.constant 0 : index
      %c0_14 = arith.constant 0 : index
      %15 = vector.load %arg5[%c0_11, %c0_12, %c0_13, %c0_14] : memref<1x2x8x32xbf16, #tpu.memory_space<vmem>>, vector<1x2x8x32xbf16>
      %16 = vector.shape_cast %15 : vector<1x2x8x32xbf16> to vector<2x8x32xbf16>
      %cst = arith.constant dense<0.000000e+00> : vector<2x8x8xf32>
      %17 = tpu.matmul %12, %14, %cst {dimension_numbers = #tpu.dot_dimension_numbers<[2], [2], [1], [1], [0, 0, 0, 1, 1, 1], [0], [0]>} : vector<2x8x32xbf16>, vector<2x8x32xbf16>, vector<2x8x8xf32> -> vector<2x8x8xf32>
      %18 = tpu.iota {dimensions = array<i32: 0>} : vector<8x8xi32>
      %19 = tpu.iota {dimensions = array<i32: 1>} : vector<8x8xi32>
      %20 = arith.cmpi sgt, %19, %18 : vector<8x8xi32>
      %21 = vector.shape_cast %20 : vector<8x8xi1> to vector<1x8x8xi1>
      %cst_15 = arith.constant -1.000000e+30 : f32
      %22 = vector.shape_cast %21 : vector<1x8x8xi1> to vector<1x8x8xi1>
      %23 = vector.broadcast %22 : vector<1x8x8xi1> to vector<2x8x8xi1>
      %24 = vector.broadcast %cst_15 : f32 to vector<2x8x8xf32>
      %25 = arith.select %23, %24, %17 : vector<2x8x8xi1>, vector<2x8x8xf32>
      %c0_16 = arith.constant 0 : index
      %c0_17 = arith.constant 0 : index
      %c0_18 = arith.constant 0 : index
      %26 = vector.load %arg8[%c0_16, %c0_17, %c0_18] : memref<2x8x128xf32, #tpu.memory_space<vmem>>, vector<2x8x128xf32>
      %c0_19 = arith.constant 0 : index
      %c0_20 = arith.constant 0 : index
      %c0_21 = arith.constant 0 : index
      %27 = vector.load %arg9[%c0_19, %c0_20, %c0_21] : memref<2x8x128xf32, #tpu.memory_space<vmem>>, vector<2x8x128xf32>
      %cst_22 = arith.constant dense<0xFF800000> : vector<2x8xf32>
      %28 = vector.multi_reduction <maximumf>, %25, %cst_22 [2] : vector<2x8x8xf32> to vector<2x8xf32>
      %29 = vector.shape_cast %28 : vector<2x8xf32> to vector<2x8x1xf32>
      %30 = vector.broadcast %29 : vector<2x8x1xf32> to vector<2x8x128xf32>
      %31 = arith.maximumf %26, %30 : vector<2x8x128xf32>
      %32 = arith.subf %26, %31 : vector<2x8x128xf32>
      %33 = math.exp %32 : vector<2x8x128xf32>
      %34 = vector.extract_strided_slice %31 {offsets = [0, 0, 0], sizes = [2, 8, 1], strides = [1, 1, 1]} : vector<2x8x128xf32> to vector<2x8x1xf32>
      %35 = vector.broadcast %34 : vector<2x8x1xf32> to vector<2x8x8xf32>
      %36 = arith.subf %25, %35 : vector<2x8x8xf32>
      %37 = math.exp %36 : vector<2x8x8xf32>
      %38 = arith.mulf %33, %27 : vector<2x8x128xf32>
      %cst_23 = arith.constant dense<0.000000e+00> : vector<2x8xf32>
      %39 = vector.multi_reduction <add>, %37, %cst_23 [2] : vector<2x8x8xf32> to vector<2x8xf32>
      %40 = vector.shape_cast %39 : vector<2x8xf32> to vector<2x8x1xf32>
      %41 = vector.broadcast %40 : vector<2x8x1xf32> to vector<2x8x128xf32>
      %42 = arith.addf %38, %41 : vector<2x8x128xf32>
      %c0_24 = arith.constant 0 : index
      %c0_25 = arith.constant 0 : index
      %c0_26 = arith.constant 0 : index
      %43 = vector.load %arg9[%c0_24, %c0_25, %c0_26] : memref<2x8x128xf32, #tpu.memory_space<vmem>>, vector<2x8x128xf32>
      tpu.vector_store %arg9[%c0_24, %c0_25, %c0_26], %42 {strides = array<i32>} : memref<2x8x128xf32, #tpu.memory_space<vmem>>, vector<2x8x128xf32>,
      %c0_27 = arith.constant 0 : index
      %c0_28 = arith.constant 0 : index
      %c0_29 = arith.constant 0 : index
      %44 = vector.load %arg8[%c0_27, %c0_28, %c0_29] : memref<2x8x128xf32, #tpu.memory_space<vmem>>, vector<2x8x128xf32>
      tpu.vector_store %arg8[%c0_27, %c0_28, %c0_29], %31 {strides = array<i32>} : memref<2x8x128xf32, #tpu.memory_space<vmem>>, vector<2x8x128xf32>,
      %45 = arith.truncf %37 : vector<2x8x8xf32> to vector<2x8x8xbf16>
      %cst_30 = arith.constant dense<0.000000e+00> : vector<2x8x32xf32>
      %46 = tpu.matmul %45, %16, %cst_30 {dimension_numbers = #tpu.dot_dimension_numbers<[2], [1], [1], [2], [0, 0, 0, 1, 1, 2], [0], [0]>} : vector<2x8x8xbf16>, vector<2x8x32xbf16>, vector<2x8x32xf32> -> vector<2x8x32xf32>
      %47 = vector.extract_strided_slice %33 {offsets = [0, 0, 0], sizes = [2, 8, 1], strides = [1, 1, 1]} : vector<2x8x128xf32> to vector<2x8x1xf32>
      %c0_31 = arith.constant 0 : index
      %c0_32 = arith.constant 0 : index
      %c0_33 = arith.constant 0 : index
      %48 = vector.load %arg10[%c0_31, %c0_32, %c0_33] : memref<2x8x32xf32, #tpu.memory_space<vmem>>, vector<2x8x32xf32>
      %49 = vector.broadcast %47 : vector<2x8x1xf32> to vector<2x8x32xf32>
      %50 = arith.mulf %49, %48 : vector<2x8x32xf32>
      %51 = arith.addf %50, %46 : vector<2x8x32xf32>
      %c0_34 = arith.constant 0 : index
      %c0_35 = arith.constant 0 : index
      %c0_36 = arith.constant 0 : index
      %52 = vector.load %arg10[%c0_34, %c0_35, %c0_36] : memref<2x8x32xf32, #tpu.memory_space<vmem>>, vector<2x8x32xf32>
      tpu.vector_store %arg10[%c0_34, %c0_35, %c0_36], %51 {strides = array<i32>} : memref<2x8x32xf32, #tpu.memory_space<vmem>>, vector<2x8x32xf32>,
    } else {
    }
    %c0_i32_3 = arith.constant 0 : i32
    %9 = arith.cmpi eq, %arg2, %c0_i32_3 : i32
    %10 = arith.extui %9 : i1 to i32
    %c0_i32_4 = arith.constant 0 : i32
    %11 = arith.cmpi ne, %10, %c0_i32_4 : i32
    scf.if %11 {
      %c0 = arith.constant 0 : index
      %c0_5 = arith.constant 0 : index
      %c0_6 = arith.constant 0 : index
      %12 = vector.load %arg9[%c0, %c0_5, %c0_6] : memref<2x8x128xf32, #tpu.memory_space<vmem>>, vector<2x8x128xf32>
      %13 = vector.extract_strided_slice %12 {offsets = [0, 0, 0], sizes = [2, 8, 1], strides = [1, 1, 1]} : vector<2x8x128xf32> to vector<2x8x1xf32>
      %14 = tpu.reciprocal %13 {approx = true} : vector<2x8x1xf32> -> vector<2x8x1xf32>
      %c0_7 = arith.constant 0 : index
      %c0_8 = arith.constant 0 : index
      %c0_9 = arith.constant 0 : index
      %15 = vector.load %arg10[%c0_7, %c0_8, %c0_9] : memref<2x8x32xf32, #tpu.memory_space<vmem>>, vector<2x8x32xf32>
      %16 = vector.broadcast %14 : vector<2x8x1xf32> to vector<2x8x32xf32>
      %17 = arith.mulf %15, %16 : vector<2x8x32xf32>
      %18 = vector.extract_strided_slice %17 {offsets = [0, 0, 0], sizes = [1, 8, 32], strides = [1, 1, 1]} : vector<2x8x32xf32> to vector<1x8x32xf32>
      %19 = vector.shape_cast %18 : vector<1x8x32xf32> to vector<8x32xf32>
      %c0_10 = arith.constant 0 : index
      %c0_11 = arith.constant 0 : index
      %c0_12 = arith.constant 0 : index
      %20 = vector.load %arg6[%c0_10, %c0_11, %c0_12] : memref<1x8x64xf32, #tpu.memory_space<vmem>>, vector<1x8x32xf32>
      %21 = vector.shape_cast %20 : vector<1x8x32xf32> to vector<8x32xf32>
      %22 = vector.shape_cast %19 : vector<8x32xf32> to vector<1x8x32xf32>
      tpu.vector_store %arg6[%c0_10, %c0_11, %c0_12], %22 {strides = array<i32>} : memref<1x8x64xf32, #tpu.memory_space<vmem>>, vector<1x8x32xf32>,
      %23 = vector.extract_strided_slice %17 {offsets = [1, 0, 0], sizes = [1, 8, 32], strides = [1, 1, 1]} : vector<2x8x32xf32> to vector<1x8x32xf32>
      %24 = vector.shape_cast %23 : vector<1x8x32xf32> to vector<8x32xf32>
      %c0_13 = arith.constant 0 : index
      %c0_14 = arith.constant 0 : index
      %c32 = arith.constant 32 : index
      %25 = vector.load %arg6[%c0_13, %c0_14, %c32] : memref<1x8x64xf32, #tpu.memory_space<vmem>>, vector<1x8x32xf32>
      %26 = vector.shape_cast %25 : vector<1x8x32xf32> to vector<8x32xf32>
      %27 = vector.shape_cast %24 : vector<8x32xf32> to vector<1x8x32xf32>
      tpu.vector_store %arg6[%c0_13, %c0_14, %c32], %27 {strides = array<i32>} : memref<1x8x64xf32, #tpu.memory_space<vmem>>, vector<1x8x32xf32>,
    } else {
    }
    return
  }
  func.func @transform_0(%arg0: i32, %arg1: i32, %arg2: i32) -> (i32, i32, i32, i32) {
    %c0_i32 = arith.constant 0 : i32
    %c0_i32_0 = arith.constant 0 : i32
    %c0_i32_1 = arith.constant 0 : i32
    return %arg0, %c0_i32, %arg1, %c0_i32_0 : i32, i32, i32, i32
  }
  func.func @transform_1(%arg0: i32, %arg1: i32, %arg2: i32) -> (i32, i32, i32, i32) {
    %0 = arith.minsi %arg2, %arg1 : i32
    %c0_i32 = arith.constant 0 : i32
    %c0_i32_0 = arith.constant 0 : i32
    %c0_i32_1 = arith.constant 0 : i32
    return %arg0, %c0_i32, %0, %c0_i32_0 : i32, i32, i32, i32
  }
  func.func @transform_2(%arg0: i32, %arg1: i32, %arg2: i32) -> (i32, i32, i32, i32) {
    %0 = arith.minsi %arg2, %arg1 : i32
    %c0_i32 = arith.constant 0 : i32
    %c0_i32_0 = arith.constant 0 : i32
    %c0_i32_1 = arith.constant 0 : i32
    return %arg0, %c0_i32, %0, %c0_i32_0 : i32, i32, i32, i32
  }
  func.func @transform_3(%arg0: i32, %arg1: i32, %arg2: i32) -> (i32, i32, i32) {
    %c0_i32 = arith.constant 0 : i32
    %c0_i32_0 = arith.constant 0 : i32
    return %arg0, %arg1, %c0_i32 : i32, i32, i32
  }
}

</mosaic_0001>

<llo_original>
// kernel: tpu_custom_call.1
$region0: #{tpu_custom_call.1}
  #allocation0 [shape = 'u32[]', space=smem, size = 0x4, offset = 0x4, fixed_abs, tag = 'smem constant byte address 0x4 - core index']
  #allocation1 [shape = 'u32[144,128]{1,0:T(1,128)}', space=vmem, size = 0x12000, scoped, tag = 'internal scratch']
  #allocation2 [shape = 'bf16[2,8,32]{2,1,0:T(8,128)(2,1)}', space=vmem, size = 0x1000, scoped, tag = 'scratch operand']
  #allocation3 [shape = 'f32[2,8,128]{2,1,0:T(8,128)}', space=vmem, size = 0x2000, scoped, tag = 'scratch operand']
  #allocation4 [shape = 'f32[2,8,128]{2,1,0:T(8,128)}', space=vmem, size = 0x2000, scoped, tag = 'scratch operand']
  #allocation5 [shape = 'f32[2,8,32]{2,1,0:T(8,128)}', space=vmem, size = 0x2000, scoped, tag = 'scratch operand']
  %s0 = inlined_call_operand.hbm [shape: bf16[2,2,8,32], index: 0, kind: input, shape index: {}]
  %s1 = inlined_call_operand.hbm [shape: bf16[2,2,8,32], index: 1, kind: input, shape index: {}]
  %s2 = inlined_call_operand.hbm [shape: bf16[2,2,8,32], index: 2, kind: input, shape index: {}]
  %s3 = inlined_call_operand.hbm [shape: f32[2,8,64], index: 3, kind: output, shape index: {}]
  %s4 = sld [smem:[#allocation0]]
  $region73: #{tpu_custom_call.1} parent=0
    _
  %s6 = ssub.s32 1, %s4
  %s7 = scalar_select 0, %s6, %s4
  $region1: #{tpu_custom_call.1} parent=0
    #allocation6 [shape = 'u8[8192]{0}', space=vmem, size = 0x2000, scoped, tag = 'input window, operand 0']
    #allocation7 [shape = 's32[2]{0}', space=sflag, size = 0x8, scoped, tag = 'scoped memory for tpu_custom_call.1']
    #allocation8 [shape = 's32[2]{0}', space=sflag, size = 0x8, scoped, tag = 'scoped memory for tpu_custom_call.1']
    #allocation9 [shape = 'u8[8192]{0}', space=vmem, size = 0x2000, scoped, tag = 'input window, operand 1']
    #allocation10 [shape = 's32[2]{0}', space=sflag, size = 0x8, scoped, tag = 'scoped memory for tpu_custom_call.1']
    #allocation11 [shape = 'u8[8192]{0}', space=vmem, size = 0x2000, scoped, tag = 'input window, operand 2']
    #allocation12 [shape = 'u8[8192]{0}', space=vmem, size = 0x2000, scoped, tag = 'output window, operand 0']
    %8 = vsyncpa [#allocation7], 0
    %s9 = scalar_lea.sflag [#allocation7], 1
    %10 = vsyncpa %s9, 0
    %11 = vsyncpa [#allocation10], 0
    %s12 = scalar_lea.sflag [#allocation10], 1
    %13 = vsyncpa %s12, 0
    %14 = vsyncpa [#allocation8], 0
    %s15 = scalar_lea.sflag [#allocation8], 1
    %16 = vsyncpa %s15, 0
    loop: start=0, step=1, limit=4
    $region2: #{tpu_custom_call.1} parent=1 // loop_pre_header
      _
    $region3: #{tpu_custom_call.1} parent=1 // loop_header
      %s18 = sphi 0, %s22
      %p19 = scmp.ge.s32.totalorder %s18, 4
      %s25 = sphi 0, %s44
      %s26 = sphi 0, %s40
      %s27 = sphi 0, %s36
      %s28 = sphi 0, %s25
      %s29 = sphi 0, %s26
      %s30 = sphi 0, %s27
      %s31 = sphi 0, %s28
      %s32 = sphi 0, %s29
      %s33 = sphi 0, %s30
      %s49 = sphi 0, %s51
      %s52 = sphi 0, %s49
      %s53 = sphi 0, %s52
      %s69 = sphi 0, %s53
      %s81 = sphi 0, %s83
      %s84 = sphi 0, %s81
      %s85 = sphi 0, %s84
      %s101 = sphi 0, %s85
      %s113 = sphi 0, %s115
      %s116 = sphi 0, %s113
      %s117 = sphi 0, %s116
      %s133 = sphi 0, %s117
      %s141 = sphi 0, %s143
      %s144 = sphi 0, %s141
      %s145 = sphi 0, %s144
      %s161 = sphi 0, %s145
    $region4: #{tpu_custom_call.1} parent=1 // loop_header_branch
      %21 = sbr.rel (%p19) target = $region8
    $region5: #{tpu_custom_call.1} parent=1 // loop_body
      %s23 = ssub.s32 %s18, 1
      %s24 = ssub.s32 %s18, 2
      %s34 = sadd.s32 1, %s27
      %p35 = scmp.ge.s32.totalorder %s34, 1
      %s36 = scalar_select %p35, 0, %s34
      %s37 = sadd.s32 1, %s26
      %s38 = scalar_select %p35, %s37, %s26
      %p39 = scmp.ge.s32.totalorder %s38, 1
      %s40 = scalar_select %p39, 0, %s38
      %s41 = sadd.s32 1, %s25
      %s42 = scalar_select %p39, %s41, %s25
      %p43 = scmp.ge.s32.totalorder %s42, 2
      %s44 = scalar_select %p43, 0, %s42
      %s45 = ssub.s32 %s25, %s44
      %s46 = ssub.s32 %s26, %s40
      %s47 = sor.u32 %s45, %s46
      %p48 = scmp.eq.s32.totalorder %s47, 0
      %s50 = sadd.s32 %s49, 1
      %s51 = scalar_select %p48, %s49, %s50
      %p54 = pneg %p48
      %p55 = scmp.eq.s32.totalorder %s18, 1
      %p56 = por %p54, %p55
      %p57 = scmp.ne.s32.totalorder %s49, %s52
      %p58 = scmp.eq.s32.totalorder %s18, 0
      %p59 = por %p57, %p58
      %p60 = scmp.ne.s32.totalorder %s49, %s52
      %p61 = scmp.eq.s32.totalorder %s23, 1
      %p62 = por %p60, %p61
      %p63 = scmp.ne.s32.totalorder %s52, %s53
      %p64 = scmp.eq.s32.totalorder %s23, 0
      %p65 = por %p63, %p64
      %p66 = scmp.ne.s32.totalorder %s52, %s53
      %p67 = scmp.eq.s32.totalorder %s24, 1
      %p68 = por %p66, %p67
      %p70 = scmp.ne.s32.totalorder %s53, %s69
      %p71 = scmp.eq.s32.totalorder %s24, 0
      %p72 = por %p70, %p71
      %p73 = scmp.lt.s32.totalorder %s27, %s26
      %s74 = scalar_select %p73, %s27, %s26
      %p75 = scmp.lt.s32.totalorder %s36, %s40
      %s76 = scalar_select %p75, %s36, %s40
      %s77 = ssub.s32 %s25, %s44
      %s78 = ssub.s32 %s74, %s76
      %s79 = sor.u32 %s77, %s78
      %p80 = scmp.eq.s32.totalorder %s79, 0
      %s82 = sadd.s32 %s81, 1
      %s83 = scalar_select %p80, %s81, %s82
      %p86 = pneg %p80
      %p87 = scmp.eq.s32.totalorder %s18, 1
      %p88 = por %p86, %p87
      %p89 = scmp.ne.s32.totalorder %s81, %s84
      %p90 = scmp.eq.s32.totalorder %s18, 0
      %p91 = por %p89, %p90
      %p92 = scmp.ne.s32.totalorder %s81, %s84
      %p93 = scmp.eq.s32.totalorder %s23, 1
      %p94 = por %p92, %p93
      %p95 = scmp.ne.s32.totalorder %s84, %s85
      %p96 = scmp.eq.s32.totalorder %s23, 0
      %p97 = por %p95, %p96
      %p98 = scmp.ne.s32.totalorder %s84, %s85
      %p99 = scmp.eq.s32.totalorder %s24, 1
      %p100 = por %p98, %p99
      %p102 = scmp.ne.s32.totalorder %s85, %s101
      %p103 = scmp.eq.s32.totalorder %s24, 0
      %p104 = por %p102, %p103
      %p105 = scmp.lt.s32.totalorder %s27, %s26
      %s106 = scalar_select %p105, %s27, %s26
      %p107 = scmp.lt.s32.totalorder %s36, %s40
      %s108 = scalar_select %p107, %s36, %s40
      %s109 = ssub.s32 %s25, %s44
      %s110 = ssub.s32 %s106, %s108
      %s111 = sor.u32 %s109, %s110
      %p112 = scmp.eq.s32.totalorder %s111, 0
      %s114 = sadd.s32 %s113, 1
      %s115 = scalar_select %p112, %s113, %s114
      %p118 = pneg %p112
      %p119 = scmp.eq.s32.totalorder %s18, 1
      %p120 = por %p118, %p119
      %p121 = scmp.ne.s32.totalorder %s113, %s116
      %p122 = scmp.eq.s32.totalorder %s18, 0
      %p123 = por %p121, %p122
      %p124 = scmp.ne.s32.totalorder %s113, %s116
      %p125 = scmp.eq.s32.totalorder %s23, 1
      %p126 = por %p124, %p125
      %p127 = scmp.ne.s32.totalorder %s116, %s117
      %p128 = scmp.eq.s32.totalorder %s23, 0
      %p129 = por %p127, %p128
      %p130 = scmp.ne.s32.totalorder %s116, %s117
      %p131 = scmp.eq.s32.totalorder %s24, 1
      %p132 = por %p130, %p131
      %p134 = scmp.ne.s32.totalorder %s117, %s133
      %p135 = scmp.eq.s32.totalorder %s24, 0
      %p136 = por %p134, %p135
      %s137 = ssub.s32 %s25, %s44
      %s138 = ssub.s32 %s26, %s40
      %s139 = sor.u32 %s137, %s138
      %p140 = scmp.eq.s32.totalorder %s139, 0
      %s142 = sadd.s32 %s141, 1
      %s143 = scalar_select %p140, %s141, %s142
      %p146 = pneg %p140
      %p147 = scmp.eq.s32.totalorder %s18, 1
      %p148 = por %p146, %p147
      %p149 = scmp.ne.s32.totalorder %s141, %s144
      %p150 = scmp.eq.s32.totalorder %s18, 0
      %p151 = por %p149, %p150
      %p152 = scmp.ne.s32.totalorder %s141, %s144
      %p153 = scmp.eq.s32.totalorder %s23, 1
      %p154 = por %p152, %p153
      %p155 = scmp.ne.s32.totalorder %s144, %s145
      %p156 = scmp.eq.s32.totalorder %s23, 0
      %p157 = por %p155, %p156
      %p158 = scmp.ne.s32.totalorder %s144, %s145
      %p159 = scmp.eq.s32.totalorder %s24, 1
      %p160 = por %p158, %p159
      %p162 = scmp.ne.s32.totalorder %s145, %s161
      %p163 = scmp.eq.s32.totalorder %s24, 0
      %p164 = por %p162, %p163
      %p165 = scmp.le.s32.totalorder 1, %s18
      %p166 = scmp.lt.s32.totalorder %s18, 3
      %p167 = pnand %p165, %p166
      %p168 = pneg %p167
      // Predicated region
      $region9: #{tpu_custom_call.1} parent=5 // pred_check
        _
      $region10: #{tpu_custom_call.1} parent=5 // pred_check_branch
        %170 = sbr.rel (%p167) target = $region12
      $region11: #{tpu_custom_call.1} parent=5 // pred_region
        %s171 = ssub.s32 %s18, 1
      $region12: #{tpu_custom_call.1} parent=5 // pred_fallthru
        _
      %p172 = scmp.lt.s32.totalorder %s18, 2
      // Predicated region
      $region13: #{tpu_custom_call.1} parent=5 // pred_check
        %p173 = pneg %p172
      $region14: #{tpu_custom_call.1} parent=5 // pred_check_branch
        %175 = sbr.rel (%p173) target = $region16
      $region15: #{tpu_custom_call.1} parent=5 // pred_region
        // Predicated region
        $region17: #{tpu_custom_call.1} parent=15 // pred_check
          %p176 = pneg %p59
        $region18: #{tpu_custom_call.1} parent=15 // pred_check_branch
          %178 = sbr.rel (%p176) target = $region20
        $region19: #{tpu_custom_call.1} parent=15 // pred_region
          %s179 = sand.u32 %s49, 1
          %s180 = scalar_lea.sflag [#allocation7], %s179
          %s181 = sand.u32 %s49, 1
          %s182 = smul.addr %s181, 8
          %s183 = scalar_lea.vmem [#allocation6], %s182
          %s185 = ssub.s32 128, 128
          %186 = vsyncadd %s180, %s185
          %s187 = smul.addr %s25, 2
          %s188 = sadd.s32 %s26, %s187
          %s189 = smul.addr %s188, 64
          %s190 = scalar_lea.hbm %s0, %s189
          %s191 = sshll.u32 %s183, 4
          %s192 = int_to_ptr.vmem [resolvable:$true] %s191
          %197 = dma.hbm_to_vmem [thread:$0]  %s190, 128, %s192, %s180, 64, 64, 4
        $region20: #{tpu_custom_call.1} parent=15 // pred_fallthru
          _
        // Predicated region
        $region21: #{tpu_custom_call.1} parent=15 // pred_check
          %p198 = pneg %p91
        $region22: #{tpu_custom_call.1} parent=15 // pred_check_branch
          %200 = sbr.rel (%p198) target = $region24
        $region23: #{tpu_custom_call.1} parent=15 // pred_region
          %s201 = sand.u32 %s18, 1
          %s202 = scalar_lea.sflag [#allocation10], %s201
          %s203 = sand.u32 %s81, 1
          %s204 = smul.addr %s203, 8
          %s205 = scalar_lea.vmem [#allocation9], %s204
          %p206 = scmp.lt.s32.totalorder %s27, %s26
          %s207 = scalar_select %p206, %s27, %s26
          %s209 = ssub.s32 128, 128
          %210 = vsyncadd %s202, %s209
          %s211 = smul.addr %s25, 2
          %s212 = sadd.s32 %s207, %s211
          %s213 = smul.addr %s212, 64
          %s214 = scalar_lea.hbm %s1, %s213
          %s215 = sshll.u32 %s205, 4
          %s216 = int_to_ptr.vmem [resolvable:$true] %s215
          %221 = dma.hbm_to_vmem [thread:$0]  %s214, 128, %s216, %s202, 64, 64, 4
        $region24: #{tpu_custom_call.1} parent=15 // pred_fallthru
          _
        // Predicated region
        $region25: #{tpu_custom_call.1} parent=15 // pred_check
          %p222 = pneg %p123
        $region26: #{tpu_custom_call.1} parent=15 // pred_check_branch
          %224 = sbr.rel (%p222) target = $region28
        $region27: #{tpu_custom_call.1} parent=15 // pred_region
          %s225 = sand.u32 %s18, 1
          %s226 = scalar_lea.sflag [#allocation10], %s225
          %s227 = sand.u32 %s113, 1
          %s228 = smul.addr %s227, 8
          %s229 = scalar_lea.vmem [#allocation11], %s228
          %p230 = scmp.lt.s32.totalorder %s27, %s26
          %s231 = scalar_select %p230, %s27, %s26
          %s233 = ssub.s32 128, 128
          %234 = vsyncadd %s226, %s233
          %s235 = smul.addr %s25, 2
          %s236 = sadd.s32 %s231, %s235
          %s237 = smul.addr %s236, 64
          %s238 = scalar_lea.hbm %s2, %s237
          %s239 = sshll.u32 %s229, 4
          %s240 = int_to_ptr.vmem [resolvable:$true] %s239
          %245 = dma.hbm_to_vmem [thread:$0]  %s238, 128, %s240, %s226, 64, 64, 4
        $region28: #{tpu_custom_call.1} parent=15 // pred_fallthru
          _
      $region16: #{tpu_custom_call.1} parent=5 // pred_fallthru
        _
      %p246 = scmp.le.s32.totalorder 1, %s18
      %p247 = scmp.lt.s32.totalorder %s18, 3
      %p248 = pnand %p246, %p247
      %p249 = pneg %p248
      // Predicated region
      $region29: #{tpu_custom_call.1} parent=5 // pred_check
        _
      $region30: #{tpu_custom_call.1} parent=5 // pred_check_branch
        %251 = sbr.rel (%p248) target = $region32
      $region31: #{tpu_custom_call.1} parent=5 // pred_region
        %s252 = ssub.s32 %s18, 1
        %s253 = sand.u32 %s52, 1
        %s254 = scalar_lea.sflag [#allocation7], %s253
        %s255 = sand.u32 %s52, 1
        %s256 = smul.addr %s255, 8
        %s257 = scalar_lea.vmem [#allocation6], %s256
        // Predicated region
        $region33: #{tpu_custom_call.1} parent=31 // pred_check
          %p258 = pneg %p65
        $region34: #{tpu_custom_call.1} parent=31 // pred_check_branch
          %260 = sbr.rel (%p258) target = $region36
        $region35: #{tpu_custom_call.1} parent=31 // pred_region
          %261 = dma.done %s254, 128
        $region36: #{tpu_custom_call.1} parent=31 // pred_fallthru
          _
        %s262 = sand.u32 %s23, 1
        %s263 = scalar_lea.sflag [#allocation10], %s262
        %s264 = sand.u32 %s84, 1
        %s265 = smul.addr %s264, 8
        %s266 = scalar_lea.vmem [#allocation9], %s265
        // Predicated region
        $region37: #{tpu_custom_call.1} parent=31 // pred_check
          %p267 = pneg %p97
        $region38: #{tpu_custom_call.1} parent=31 // pred_check_branch
          %269 = sbr.rel (%p267) target = $region40
        $region39: #{tpu_custom_call.1} parent=31 // pred_region
          %270 = dma.done %s263, 128
        $region40: #{tpu_custom_call.1} parent=31 // pred_fallthru
          _
        %s271 = sand.u32 %s23, 1
        %s272 = scalar_lea.sflag [#allocation10], %s271
        %s273 = sand.u32 %s116, 1
        %s274 = smul.addr %s273, 8
        %s275 = scalar_lea.vmem [#allocation11], %s274
        // Predicated region
        $region41: #{tpu_custom_call.1} parent=31 // pred_check
          %p276 = pneg %p129
        $region42: #{tpu_custom_call.1} parent=31 // pred_check_branch
          %278 = sbr.rel (%p276) target = $region44
        $region43: #{tpu_custom_call.1} parent=31 // pred_region
          %279 = dma.done %s272, 128
        $region44: #{tpu_custom_call.1} parent=31 // pred_fallthru
          _
        %s280 = sand.u32 %s52, 1
        %s281 = scalar_lea.sflag [#allocation7], %s280
        %s282 = sand.u32 %s52, 1
        %s283 = smul.addr %s282, 8
        %s284 = scalar_lea.vmem [#allocation6], %s283
        %p285 = pneg %p65
        %p286 = pneg %p62
        %s287 = sand.u32 %s23, 1
        %s288 = scalar_lea.sflag [#allocation10], %s287
        %s289 = sand.u32 %s84, 1
        %s290 = smul.addr %s289, 8
        %s291 = scalar_lea.vmem [#allocation9], %s290
        %p292 = pneg %p97
        %p293 = pneg %p94
        %s294 = sand.u32 %s23, 1
        %s295 = scalar_lea.sflag [#allocation10], %s294
        %s296 = sand.u32 %s116, 1
        %s297 = smul.addr %s296, 8
        %s298 = scalar_lea.vmem [#allocation11], %s297
        %p299 = pneg %p129
        %p300 = pneg %p126
        %p301 = pneg %p157
        %p302 = pneg %p154
        %s303 = sand.u32 %s144, 1
        %s304 = scalar_lea.sflag [#allocation8], %s303
        %s305 = sand.u32 %s144, 1
        %s306 = smul.addr %s305, 8
        %s307 = scalar_lea.vmem [#allocation12], %s306
        %p308 = scmp.lt.s32.totalorder %s30, %s29
        %s309 = scalar_select %p308, %s30, %s29
        %p310 = scmp.lt.s32.totalorder %s30, %s29
        %s311 = scalar_select %p310, %s30, %s29
        %p313 = scmp.eq.s32.totalorder %s30, 0
        // Predicated region
        $region45: #{tpu_custom_call.1} parent=31 // pred_check
          %p314 = pneg %p313
        $region46: #{tpu_custom_call.1} parent=31 // pred_check_branch
          %316 = sbr.rel (%p314) target = $region48
        $region47: #{tpu_custom_call.1} parent=31 // pred_region
          %317 = vst [vmem:[#allocation3] sm:$0xff] -inf
          %318 = vst [vmem:[#allocation3 + $0x8] sm:$0xff] -inf
          %319 = vst [vmem:[#allocation4] sm:$0xff] 0.0
          %320 = vst [vmem:[#allocation4 + $0x8] sm:$0xff] 0.0
          %vm321 = vcmask 261120
          %322 = vst.msk [vmem:[#allocation5] sm:$0xff] %vm321, 0.0
          %323 = vst.msk [vmem:[#allocation5 + $0x8] sm:$0xff] %vm321, 0.0
          %v324 = vld [vmem:[%s257] sm:$0xf]
          %v325 = vld [vmem:[%s257 + $0x4] sm:$0xf]
          %v326 = vunpack.c.l.bf16 %v324
          %v327 = vunpack.c.l.bf16 %v325
          %v328 = vmul.f32 %v326, 0.17677669
          %v329 = vmul.f32 %v327, 0.17677669
          %v330 = vpack.c.bf16 %v328, %v328
          %v331 = vpack.c.bf16 %v329, %v329
          %vm332 = vcmask 257024
          %333 = vst.msk [vmem:[#allocation2] sm:$0xf] %vm332, %v330
          %334 = vst.msk [vmem:[#allocation2 + $0x4] sm:$0xf] %vm332, %v331
        $region48: #{tpu_custom_call.1} parent=31 // pred_fallthru
          _
        %p335 = scmp.lt.s32.totalorder %s30, %s29
        // Predicated region
        $region49: #{tpu_custom_call.1} parent=31 // pred_check
          %p336 = pneg %p335
        $region50: #{tpu_custom_call.1} parent=31 // pred_check_branch
          %338 = sbr.rel (%p336) target = $region52
        $region51: #{tpu_custom_call.1} parent=31 // pred_region
          %v339 = vld [vmem:[#allocation2] sm:$0xf]
          %v340 = vld [vmem:[#allocation2 + $0x4] sm:$0xf]
          %v341 = vld [vmem:[%s266] sm:$0xf]
          %v342 = vld [vmem:[%s266 + $0x4] sm:$0xf]
          %v343 = vld [vmem:[%s275] sm:$0xf]
          %v344 = vld [vmem:[%s275 + $0x4] sm:$0xf]
          %vm345 = vcmask 261120
          %v347 = vsel %vm345, %v339, 0
          %v350 = vsel %vm345, %v341, 0
          %352 = vmatprep.subr.bf16.mxu0 0
          %353 = vmatpush1.bf16.xpose.msra.mxu0 %v350
          %354 = vmatprep.subr.bf16.mxu0 0
          %355 = vmatpush1.bf16.xpose.msra.mxu0 0
          %356 = vmatprep.subr.bf16.mxu0 0
          %357 = vmatpush1.bf16.xpose.msra.mxu0 0
          %358 = vmatprep.subr.bf16.mxu0 0
          %359 = vmatpush1.bf16.xpose.msra.mxu0 0
          %360 = vmatprep.subr.bf16.mxu0 0
          %361 = vmatpush1.bf16.xpose.msra.mxu0 0
          %362 = vmatprep.subr.bf16.mxu0 0
          %363 = vmatpush1.bf16.xpose.msra.mxu0 0
          %364 = vmatprep.subr.bf16.mxu0 0
          %365 = vmatpush1.bf16.xpose.msra.mxu0 0
          %366 = vmatprep.subr.bf16.mxu0 0
          %367 = vmatpush1.bf16.xpose.msra.mxu0 0
          %368 = vmatprep.subr.bf16.mxu0 0
          %369 = vmatpush1.bf16.xpose.msra.mxu0 0
          %370 = vmatprep.subr.bf16.mxu0 0
          %371 = vmatpush1.bf16.xpose.msra.mxu0 0
          %372 = vmatprep.subr.bf16.mxu0 0
          %373 = vmatpush1.bf16.xpose.msra.mxu0 0
          %374 = vmatprep.subr.bf16.mxu0 0
          %375 = vmatpush1.bf16.xpose.msra.mxu0 0
          %376 = vmatprep.subr.bf16.mxu0 0
          %377 = vmatpush1.bf16.xpose.msra.mxu0 0
          %378 = vmatprep.subr.bf16.mxu0 0
          %379 = vmatpush1.bf16.xpose.msra.mxu0 0
          %380 = vmatprep.subr.bf16.mxu0 0
          %381 = vmatpush1.bf16.xpose.msra.mxu0 0
          %382 = vmatprep.subr.bf16.mxu0 0
          %383 = vmatpush1.bf16.xpose.msra.mxu0 0
          %384 = vmatprep.mubr.bf16.mxu0 0
          %385 = vmatmul.mubr.bf16.gmra.mrb[0].mxu0 %v347
          %v386 = vpop.f32.mrb[0].mxu0
          %v387 = vadd.f32 0.0, %v386
          %v388 = vpop.f32.mrb[0].mxu0
          %v389 = vpop.f32.mrb[0].mxu0
          %v390 = vpop.f32.mrb[0].mxu0
          %391 = vdwg.mxu0
          %v393 = vsel %vm345, %v340, 0
          %v396 = vsel %vm345, %v342, 0
          %398 = vmatprep.subr.bf16.mxu0 0
          %399 = vmatpush1.bf16.xpose.msra.mxu0 %v396
          %400 = vmatprep.subr.bf16.mxu0 0
          %401 = vmatpush1.bf16.xpose.msra.mxu0 0
          %402 = vmatprep.subr.bf16.mxu0 0
          %403 = vmatpush1.bf16.xpose.msra.mxu0 0
          %404 = vmatprep.subr.bf16.mxu0 0
          %405 = vmatpush1.bf16.xpose.msra.mxu0 0
          %406 = vmatprep.subr.bf16.mxu0 0
          %407 = vmatpush1.bf16.xpose.msra.mxu0 0
          %408 = vmatprep.subr.bf16.mxu0 0
          %409 = vmatpush1.bf16.xpose.msra.mxu0 0
          %410 = vmatprep.subr.bf16.mxu0 0
          %411 = vmatpush1.bf16.xpose.msra.mxu0 0
          %412 = vmatprep.subr.bf16.mxu0 0
          %413 = vmatpush1.bf16.xpose.msra.mxu0 0
          %414 = vmatprep.subr.bf16.mxu0 0
          %415 = vmatpush1.bf16.xpose.msra.mxu0 0
          %416 = vmatprep.subr.bf16.mxu0 0
          %417 = vmatpush1.bf16.xpose.msra.mxu0 0
          %418 = vmatprep.subr.bf16.mxu0 0
          %419 = vmatpush1.bf16.xpose.msra.mxu0 0
          %420 = vmatprep.subr.bf16.mxu0 0
          %421 = vmatpush1.bf16.xpose.msra.mxu0 0
          %422 = vmatprep.subr.bf16.mxu0 0
          %423 = vmatpush1.bf16.xpose.msra.mxu0 0
          %424 = vmatprep.subr.bf16.mxu0 0
          %425 = vmatpush1.bf16.xpose.msra.mxu0 0
          %426 = vmatprep.subr.bf16.mxu0 0
          %427 = vmatpush1.bf16.xpose.msra.mxu0 0
          %428 = vmatprep.subr.bf16.mxu0 0
          %429 = vmatpush1.bf16.xpose.msra.mxu0 0
          %430 = vmatprep.mubr.bf16.mxu0 0
          %431 = vmatmul.mubr.bf16.gmra.mrb[0].mxu0 %v393
          %v432 = vpop.f32.mrb[0].mxu0
          %v433 = vadd.f32 0.0, %v432
          %v434 = vpop.f32.mrb[0].mxu0
          %v435 = vpop.f32.mrb[0].mxu0
          %v436 = vpop.f32.mrb[0].mxu0
          %437 = vdwg.mxu0
          %v438 = vld [vmem:[#allocation3] sm:$0xff]
          %v439 = vld [vmem:[#allocation3 + $0x8] sm:$0xff]
          %v440 = vld [vmem:[#allocation4] sm:$0xff]
          %v441 = vld [vmem:[#allocation4 + $0x8] sm:$0xff]
          %vm442 = vcmask 64512
          %v443 = vsel %vm442, %v387, -inf
          %444 = vmax.xlane.f32.xlu0 %v443
          %v445 = vpop.xlane.xlu0 %444
          %v446 = vsel %vm442, %v433, -inf
          %447 = vmax.xlane.f32.xlu0 %v446
          %v448 = vpop.xlane.xlu0 %447
          %v449 = vmax.f32 %v438, %v445
          %v450 = vmax.f32 %v439, %v448
          %v451 = vsub.f32 %v438, %v449
          %v452 = vsub.f32 %v439, %v450
          %v453 = vmul.f32 %v451, 1.442695
          %v454 = vpow.pop %v453
          %v455 = vmul.f32 %v452, 1.442695
          %v456 = vpow.pop %v455
          %458 = vset.pattern.permute.xlu0 0
          %459 = vperm.xlu0 %458, %v449
          %v460 = vpop.permute.xlu0 %459
          %463 = vset.pattern.permute.xlu0 0
          %464 = vperm.xlu0 %463, %v450
          %v465 = vpop.permute.xlu0 %464
          %v467 = vsub.f32 %v387, %v460
          %v468 = vsub.f32 %v433, %v465
          %v469 = vmul.f32 %v467, 1.442695
          %v470 = vpow.pop %v469
          %v471 = vmul.f32 %v468, 1.442695
          %v472 = vpow.pop %v471
          %v473 = vmul.f32 %v454, %v440
          %v474 = vmul.f32 %v456, %v441
          %v475 = vsel %vm442, %v470, 0.0
          %476 = vadd.xlane.f32.xlu0 %v475
          %v477 = vpop.xlane.xlu0 %476
          %v478 = vsel %vm442, %v472, 0.0
          %479 = vadd.xlane.f32.xlu0 %v478
          %v480 = vpop.xlane.xlu0 %479
          %v481 = vadd.f32 %v473, %v477
          %v482 = vadd.f32 %v474, %v480
          %483 = vst [vmem:[#allocation4] sm:$0xff] %v481
          %484 = vst [vmem:[#allocation4 + $0x8] sm:$0xff] %v482
          %485 = vst [vmem:[#allocation3] sm:$0xff] %v449
          %486 = vst [vmem:[#allocation3 + $0x8] sm:$0xff] %v450
          %v487 = vpack.c.bf16 %v470, %v470
          %v488 = vpack.c.bf16 %v472, %v472
          %v490 = vsel %vm442, %v487, 0
          %vm492 = vcmask 1043456
          %v494 = vsel %vm492, %v343, 0
          %496 = vmatprep.subr.bf16.mxu0 0
          %497 = vmatpush1.bf16.msra.mxu0 %v494
          %498 = vmatprep.subr.bf16.mxu0 0
          %499 = vmatpush1.bf16.msra.mxu0 0
          %500 = vmatprep.subr.bf16.mxu0 0
          %501 = vmatpush1.bf16.msra.mxu0 0
          %502 = vmatprep.subr.bf16.mxu0 0
          %503 = vmatpush1.bf16.msra.mxu0 0
          %504 = vmatprep.subr.bf16.mxu0 0
          %505 = vmatpush1.bf16.msra.mxu0 0
          %506 = vmatprep.subr.bf16.mxu0 0
          %507 = vmatpush1.bf16.msra.mxu0 0
          %508 = vmatprep.subr.bf16.mxu0 0
          %509 = vmatpush1.bf16.msra.mxu0 0
          %510 = vmatprep.subr.bf16.mxu0 0
          %511 = vmatpush1.bf16.msra.mxu0 0
          %512 = vmatprep.subr.bf16.mxu0 0
          %513 = vmatpush1.bf16.msra.mxu0 0
          %514 = vmatprep.subr.bf16.mxu0 0
          %515 = vmatpush1.bf16.msra.mxu0 0
          %516 = vmatprep.subr.bf16.mxu0 0
          %517 = vmatpush1.bf16.msra.mxu0 0
          %518 = vmatprep.subr.bf16.mxu0 0
          %519 = vmatpush1.bf16.msra.mxu0 0
          %520 = vmatprep.subr.bf16.mxu0 0
          %521 = vmatpush1.bf16.msra.mxu0 0
          %522 = vmatprep.subr.bf16.mxu0 0
          %523 = vmatpush1.bf16.msra.mxu0 0
          %524 = vmatprep.subr.bf16.mxu0 0
          %525 = vmatpush1.bf16.msra.mxu0 0
          %526 = vmatprep.subr.bf16.mxu0 0
          %527 = vmatpush1.bf16.msra.mxu0 0
          %528 = vmatprep.mubr.bf16.mxu0 0
          %529 = vmatmul.mubr.bf16.gmra.mrb[0].mxu0 %v490
          %v530 = vpop.f32.mrb[0].mxu0
          %v531 = vadd.f32 0.0, %v530
          %v532 = vpop.f32.mrb[0].mxu0
          %v533 = vpop.f32.mrb[0].mxu0
          %v534 = vpop.f32.mrb[0].mxu0
          %535 = vdwg.mxu0
          %v537 = vsel %vm442, %v488, 0
          %v540 = vsel %vm492, %v344, 0
          %542 = vmatprep.subr.bf16.mxu0 0
          %543 = vmatpush1.bf16.msra.mxu0 %v540
          %544 = vmatprep.subr.bf16.mxu0 0
          %545 = vmatpush1.bf16.msra.mxu0 0
          %546 = vmatprep.subr.bf16.mxu0 0
          %547 = vmatpush1.bf16.msra.mxu0 0
          %548 = vmatprep.subr.bf16.mxu0 0
          %549 = vmatpush1.bf16.msra.mxu0 0
          %550 = vmatprep.subr.bf16.mxu0 0
          %551 = vmatpush1.bf16.msra.mxu0 0
          %552 = vmatprep.subr.bf16.mxu0 0
          %553 = vmatpush1.bf16.msra.mxu0 0
          %554 = vmatprep.subr.bf16.mxu0 0
          %555 = vmatpush1.bf16.msra.mxu0 0
          %556 = vmatprep.subr.bf16.mxu0 0
          %557 = vmatpush1.bf16.msra.mxu0 0
          %558 = vmatprep.subr.bf16.mxu0 0
          %559 = vmatpush1.bf16.msra.mxu0 0
          %560 = vmatprep.subr.bf16.mxu0 0
          %561 = vmatpush1.bf16.msra.mxu0 0
          %562 = vmatprep.subr.bf16.mxu0 0
          %563 = vmatpush1.bf16.msra.mxu0 0
          %564 = vmatprep.subr.bf16.mxu0 0
          %565 = vmatpush1.bf16.msra.mxu0 0
          %566 = vmatprep.subr.bf16.mxu0 0
          %567 = vmatpush1.bf16.msra.mxu0 0
          %568 = vmatprep.subr.bf16.mxu0 0
          %569 = vmatpush1.bf16.msra.mxu0 0
          %570 = vmatprep.subr.bf16.mxu0 0
          %571 = vmatpush1.bf16.msra.mxu0 0
          %572 = vmatprep.subr.bf16.mxu0 0
          %573 = vmatpush1.bf16.msra.mxu0 0
          %574 = vmatprep.mubr.bf16.mxu0 0
          %575 = vmatmul.mubr.bf16.gmra.mrb[0].mxu0 %v537
          %v576 = vpop.f32.mrb[0].mxu0
          %v577 = vadd.f32 0.0, %v576
          %v578 = vpop.f32.mrb[0].mxu0
          %v579 = vpop.f32.mrb[0].mxu0
          %v580 = vpop.f32.mrb[0].mxu0
          %581 = vdwg.mxu0
          %v582 = vld [vmem:[#allocation5] sm:$0xff]
          %v583 = vld [vmem:[#allocation5 + $0x8] sm:$0xff]
          %585 = vset.pattern.permute.xlu0 0
          %586 = vperm.xlu0 %585, %v454
          %v587 = vpop.permute.xlu0 %586
          %590 = vset.pattern.permute.xlu0 0
          %591 = vperm.xlu0 %590, %v456
          %v592 = vpop.permute.xlu0 %591
          %v594 = vmul.f32 %v587, %v582
          %v595 = vmul.f32 %v592, %v583
          %v596 = vadd.f32 %v594, %v531
          %v597 = vadd.f32 %v595, %v577
          %598 = vst.msk [vmem:[#allocation5] sm:$0xff] %vm345, %v596
          %599 = vst.msk [vmem:[#allocation5 + $0x8] sm:$0xff] %vm345, %v597
        $region52: #{tpu_custom_call.1} parent=31 // pred_fallthru
          _
        %p600 = scmp.eq.s32.totalorder %s30, %s29
        // Predicated region
        $region53: #{tpu_custom_call.1} parent=31 // pred_check
          %p601 = pneg %p600
        $region54: #{tpu_custom_call.1} parent=31 // pred_check_branch
          %603 = sbr.rel (%p601) target = $region56
        $region55: #{tpu_custom_call.1} parent=31 // pred_region
          %v604 = vld [vmem:[#allocation2] sm:$0xf]
          %v605 = vld [vmem:[#allocation2 + $0x4] sm:$0xf]
          %v606 = vld [vmem:[%s266] sm:$0xf]
          %v607 = vld [vmem:[%s266 + $0x4] sm:$0xf]
          %v608 = vld [vmem:[%s275] sm:$0xf]
          %v609 = vld [vmem:[%s275 + $0x4] sm:$0xf]
          %vm610 = vcmask 261120
          %v612 = vsel %vm610, %v604, 0
          %v615 = vsel %vm610, %v606, 0
          %617 = vmatprep.subr.bf16.mxu0 0
          %618 = vmatpush1.bf16.xpose.msra.mxu0 %v615
          %619 = vmatprep.subr.bf16.mxu0 0
          %620 = vmatpush1.bf16.xpose.msra.mxu0 0
          %621 = vmatprep.subr.bf16.mxu0 0
          %622 = vmatpush1.bf16.xpose.msra.mxu0 0
          %623 = vmatprep.subr.bf16.mxu0 0
          %624 = vmatpush1.bf16.xpose.msra.mxu0 0
          %625 = vmatprep.subr.bf16.mxu0 0
          %626 = vmatpush1.bf16.xpose.msra.mxu0 0
          %627 = vmatprep.subr.bf16.mxu0 0
          %628 = vmatpush1.bf16.xpose.msra.mxu0 0
          %629 = vmatprep.subr.bf16.mxu0 0
          %630 = vmatpush1.bf16.xpose.msra.mxu0 0
          %631 = vmatprep.subr.bf16.mxu0 0
          %632 = vmatpush1.bf16.xpose.msra.mxu0 0
          %633 = vmatprep.subr.bf16.mxu0 0
          %634 = vmatpush1.bf16.xpose.msra.mxu0 0
          %635 = vmatprep.subr.bf16.mxu0 0
          %636 = vmatpush1.bf16.xpose.msra.mxu0 0
          %637 = vmatprep.subr.bf16.mxu0 0
          %638 = vmatpush1.bf16.xpose.msra.mxu0 0
          %639 = vmatprep.subr.bf16.mxu0 0
          %640 = vmatpush1.bf16.xpose.msra.mxu0 0
          %641 = vmatprep.subr.bf16.mxu0 0
          %642 = vmatpush1.bf16.xpose.msra.mxu0 0
          %643 = vmatprep.subr.bf16.mxu0 0
          %644 = vmatpush1.bf16.xpose.msra.mxu0 0
          %645 = vmatprep.subr.bf16.mxu0 0
          %646 = vmatpush1.bf16.xpose.msra.mxu0 0
          %647 = vmatprep.subr.bf16.mxu0 0
          %648 = vmatpush1.bf16.xpose.msra.mxu0 0
          %649 = vmatprep.mubr.bf16.mxu0 0
          %650 = vmatmul.mubr.bf16.gmra.mrb[0].mxu0 %v612
          %v651 = vpop.f32.mrb[0].mxu0
          %v652 = vadd.f32 0.0, %v651
          %v653 = vpop.f32.mrb[0].mxu0
          %v654 = vpop.f32.mrb[0].mxu0
          %v655 = vpop.f32.mrb[0].mxu0
          %656 = vdwg.mxu0
          %v658 = vsel %vm610, %v605, 0
          %v661 = vsel %vm610, %v607, 0
          %663 = vmatprep.subr.bf16.mxu0 0
          %664 = vmatpush1.bf16.xpose.msra.mxu0 %v661
          %665 = vmatprep.subr.bf16.mxu0 0
          %666 = vmatpush1.bf16.xpose.msra.mxu0 0
          %667 = vmatprep.subr.bf16.mxu0 0
          %668 = vmatpush1.bf16.xpose.msra.mxu0 0
          %669 = vmatprep.subr.bf16.mxu0 0
          %670 = vmatpush1.bf16.xpose.msra.mxu0 0
          %671 = vmatprep.subr.bf16.mxu0 0
          %672 = vmatpush1.bf16.xpose.msra.mxu0 0
          %673 = vmatprep.subr.bf16.mxu0 0
          %674 = vmatpush1.bf16.xpose.msra.mxu0 0
          %675 = vmatprep.subr.bf16.mxu0 0
          %676 = vmatpush1.bf16.xpose.msra.mxu0 0
          %677 = vmatprep.subr.bf16.mxu0 0
          %678 = vmatpush1.bf16.xpose.msra.mxu0 0
          %679 = vmatprep.subr.bf16.mxu0 0
          %680 = vmatpush1.bf16.xpose.msra.mxu0 0
          %681 = vmatprep.subr.bf16.mxu0 0
          %682 = vmatpush1.bf16.xpose.msra.mxu0 0
          %683 = vmatprep.subr.bf16.mxu0 0
          %684 = vmatpush1.bf16.xpose.msra.mxu0 0
          %685 = vmatprep.subr.bf16.mxu0 0
          %686 = vmatpush1.bf16.xpose.msra.mxu0 0
          %687 = vmatprep.subr.bf16.mxu0 0
          %688 = vmatpush1.bf16.xpose.msra.mxu0 0
          %689 = vmatprep.subr.bf16.mxu0 0
          %690 = vmatpush1.bf16.xpose.msra.mxu0 0
          %691 = vmatprep.subr.bf16.mxu0 0
          %692 = vmatpush1.bf16.xpose.msra.mxu0 0
          %693 = vmatprep.subr.bf16.mxu0 0
          %694 = vmatpush1.bf16.xpose.msra.mxu0 0
          %695 = vmatprep.mubr.bf16.mxu0 0
          %696 = vmatmul.mubr.bf16.gmra.mrb[0].mxu0 %v658
          %v697 = vpop.f32.mrb[0].mxu0
          %v698 = vadd.f32 0.0, %v697
          %v699 = vpop.f32.mrb[0].mxu0
          %v700 = vpop.f32.mrb[0].mxu0
          %v701 = vpop.f32.mrb[0].mxu0
          %702 = vdwg.mxu0
          %v703 = vlaneseq
          %v704 = vshrl.u32 %v703, 7
          %v705 = vlaneseq
          %v706 = vand.u32 %v705, 127
          %vm707 = vcmp.gt.s32.totalorder %v706, %v704
          %v708 = vsel %vm707, 1, 0
          %vm709 = vcmp.eq.s32.totalorder %v708, 1
          %v710 = vsel %vm709, -1e+30, %v652
          %v711 = vsel %vm709, -1e+30, %v698
          %v712 = vld [vmem:[#allocation3] sm:$0xff]
          %v713 = vld [vmem:[#allocation3 + $0x8] sm:$0xff]
          %v714 = vld [vmem:[#allocation4] sm:$0xff]
          %v715 = vld [vmem:[#allocation4 + $0x8] sm:$0xff]
          %vm716 = vcmask 64512
          %v717 = vsel %vm716, %v710, -inf
          %718 = vmax.xlane.f32.xlu0 %v717
          %v719 = vpop.xlane.xlu0 %718
          %v720 = vsel %vm716, %v711, -inf
          %721 = vmax.xlane.f32.xlu0 %v720
          %v722 = vpop.xlane.xlu0 %721
          %v723 = vmax.f32 %v712, %v719
          %v724 = vmax.f32 %v713, %v722
          %v725 = vsub.f32 %v712, %v723
          %v726 = vsub.f32 %v713, %v724
          %v727 = vmul.f32 %v725, 1.442695
          %v728 = vpow.pop %v727
          %v729 = vmul.f32 %v726, 1.442695
          %v730 = vpow.pop %v729
          %732 = vset.pattern.permute.xlu0 0
          %733 = vperm.xlu0 %732, %v723
          %v734 = vpop.permute.xlu0 %733
          %737 = vset.pattern.permute.xlu0 0
          %738 = vperm.xlu0 %737, %v724
          %v739 = vpop.permute.xlu0 %738
          %v741 = vsub.f32 %v710, %v734
          %v742 = vsub.f32 %v711, %v739
          %v743 = vmul.f32 %v741, 1.442695
          %v744 = vpow.pop %v743
          %v745 = vmul.f32 %v742, 1.442695
          %v746 = vpow.pop %v745
          %v747 = vmul.f32 %v728, %v714
          %v748 = vmul.f32 %v730, %v715
          %v749 = vsel %vm716, %v744, 0.0
          %750 = vadd.xlane.f32.xlu0 %v749
          %v751 = vpop.xlane.xlu0 %750
          %v752 = vsel %vm716, %v746, 0.0
          %753 = vadd.xlane.f32.xlu0 %v752
          %v754 = vpop.xlane.xlu0 %753
          %v755 = vadd.f32 %v747, %v751
          %v756 = vadd.f32 %v748, %v754
          %757 = vst [vmem:[#allocation4] sm:$0xff] %v755
          %758 = vst [vmem:[#allocation4 + $0x8] sm:$0xff] %v756
          %759 = vst [vmem:[#allocation3] sm:$0xff] %v723
          %760 = vst [vmem:[#allocation3 + $0x8] sm:$0xff] %v724
          %v761 = vpack.c.bf16 %v744, %v744
          %v762 = vpack.c.bf16 %v746, %v746
          %v764 = vsel %vm716, %v761, 0
          %vm766 = vcmask 1043456
          %v768 = vsel %vm766, %v608, 0
          %770 = vmatprep.subr.bf16.mxu0 0
          %771 = vmatpush1.bf16.msra.mxu0 %v768
          %772 = vmatprep.subr.bf16.mxu0 0
          %773 = vmatpush1.bf16.msra.mxu0 0
          %774 = vmatprep.subr.bf16.mxu0 0
          %775 = vmatpush1.bf16.msra.mxu0 0
          %776 = vmatprep.subr.bf16.mxu0 0
          %777 = vmatpush1.bf16.msra.mxu0 0
          %778 = vmatprep.subr.bf16.mxu0 0
          %779 = vmatpush1.bf16.msra.mxu0 0
          %780 = vmatprep.subr.bf16.mxu0 0
          %781 = vmatpush1.bf16.msra.mxu0 0
          %782 = vmatprep.subr.bf16.mxu0 0
          %783 = vmatpush1.bf16.msra.mxu0 0
          %784 = vmatprep.subr.bf16.mxu0 0
          %785 = vmatpush1.bf16.msra.mxu0 0
          %786 = vmatprep.subr.bf16.mxu0 0
          %787 = vmatpush1.bf16.msra.mxu0 0
          %788 = vmatprep.subr.bf16.mxu0 0
          %789 = vmatpush1.bf16.msra.mxu0 0
          %790 = vmatprep.subr.bf16.mxu0 0
          %791 = vmatpush1.bf16.msra.mxu0 0
          %792 = vmatprep.subr.bf16.mxu0 0
          %793 = vmatpush1.bf16.msra.mxu0 0
          %794 = vmatprep.subr.bf16.mxu0 0
          %795 = vmatpush1.bf16.msra.mxu0 0
          %796 = vmatprep.subr.bf16.mxu0 0
          %797 = vmatpush1.bf16.msra.mxu0 0
          %798 = vmatprep.subr.bf16.mxu0 0
          %799 = vmatpush1.bf16.msra.mxu0 0
          %800 = vmatprep.subr.bf16.mxu0 0
          %801 = vmatpush1.bf16.msra.mxu0 0
          %802 = vmatprep.mubr.bf16.mxu0 0
          %803 = vmatmul.mubr.bf16.gmra.mrb[0].mxu0 %v764
          %v804 = vpop.f32.mrb[0].mxu0
          %v805 = vadd.f32 0.0, %v804
          %v806 = vpop.f32.mrb[0].mxu0
          %v807 = vpop.f32.mrb[0].mxu0
          %v808 = vpop.f32.mrb[0].mxu0
          %809 = vdwg.mxu0
          %v811 = vsel %vm716, %v762, 0
          %v814 = vsel %vm766, %v609, 0
          %816 = vmatprep.subr.bf16.mxu0 0
          %817 = vmatpush1.bf16.msra.mxu0 %v814
          %818 = vmatprep.subr.bf16.mxu0 0
          %819 = vmatpush1.bf16.msra.mxu0 0
          %820 = vmatprep.subr.bf16.mxu0 0
          %821 = vmatpush1.bf16.msra.mxu0 0
          %822 = vmatprep.subr.bf16.mxu0 0
          %823 = vmatpush1.bf16.msra.mxu0 0
          %824 = vmatprep.subr.bf16.mxu0 0
          %825 = vmatpush1.bf16.msra.mxu0 0
          %826 = vmatprep.subr.bf16.mxu0 0
          %827 = vmatpush1.bf16.msra.mxu0 0
          %828 = vmatprep.subr.bf16.mxu0 0
          %829 = vmatpush1.bf16.msra.mxu0 0
          %830 = vmatprep.subr.bf16.mxu0 0
          %831 = vmatpush1.bf16.msra.mxu0 0
          %832 = vmatprep.subr.bf16.mxu0 0
          %833 = vmatpush1.bf16.msra.mxu0 0
          %834 = vmatprep.subr.bf16.mxu0 0
          %835 = vmatpush1.bf16.msra.mxu0 0
          %836 = vmatprep.subr.bf16.mxu0 0
          %837 = vmatpush1.bf16.msra.mxu0 0
          %838 = vmatprep.subr.bf16.mxu0 0
          %839 = vmatpush1.bf16.msra.mxu0 0
          %840 = vmatprep.subr.bf16.mxu0 0
          %841 = vmatpush1.bf16.msra.mxu0 0
          %842 = vmatprep.subr.bf16.mxu0 0
          %843 = vmatpush1.bf16.msra.mxu0 0
          %844 = vmatprep.subr.bf16.mxu0 0
          %845 = vmatpush1.bf16.msra.mxu0 0
          %846 = vmatprep.subr.bf16.mxu0 0
          %847 = vmatpush1.bf16.msra.mxu0 0
          %848 = vmatprep.mubr.bf16.mxu0 0
          %849 = vmatmul.mubr.bf16.gmra.mrb[0].mxu0 %v811
          %v850 = vpop.f32.mrb[0].mxu0
          %v851 = vadd.f32 0.0, %v850
          %v852 = vpop.f32.mrb[0].mxu0
          %v853 = vpop.f32.mrb[0].mxu0
          %v854 = vpop.f32.mrb[0].mxu0
          %855 = vdwg.mxu0
          %v856 = vld [vmem:[#allocation5] sm:$0xff]
          %v857 = vld [vmem:[#allocation5 + $0x8] sm:$0xff]
          %859 = vset.pattern.permute.xlu0 0
          %860 = vperm.xlu0 %859, %v728
          %v861 = vpop.permute.xlu0 %860
          %864 = vset.pattern.permute.xlu0 0
          %865 = vperm.xlu0 %864, %v730
          %v866 = vpop.permute.xlu0 %865
          %v868 = vmul.f32 %v861, %v856
          %v869 = vmul.f32 %v866, %v857
          %v870 = vadd.f32 %v868, %v805
          %v871 = vadd.f32 %v869, %v851
          %872 = vst.msk [vmem:[#allocation5] sm:$0xff] %vm610, %v870
          %873 = vst.msk [vmem:[#allocation5 + $0x8] sm:$0xff] %vm610, %v871
        $region56: #{tpu_custom_call.1} parent=31 // pred_fallthru
          _
        // Predicated region
        $region57: #{tpu_custom_call.1} parent=31 // pred_check
          %p874 = pneg %p313
        $region58: #{tpu_custom_call.1} parent=31 // pred_check_branch
          %876 = sbr.rel (%p874) target = $region60
        $region59: #{tpu_custom_call.1} parent=31 // pred_region
          %v877 = vld [vmem:[#allocation4] sm:$0xff]
          %v878 = vld [vmem:[#allocation4 + $0x8] sm:$0xff]
          %v879 = vrcp.pop %v877
          %v880 = vrcp.pop %v878
          %v881 = vld [vmem:[#allocation5] sm:$0xff]
          %v882 = vld [vmem:[#allocation5 + $0x8] sm:$0xff]
          %884 = vset.pattern.permute.xlu0 0
          %885 = vperm.xlu0 %884, %v879
          %v886 = vpop.permute.xlu0 %885
          %889 = vset.pattern.permute.xlu0 0
          %890 = vperm.xlu0 %889, %v880
          %v891 = vpop.permute.xlu0 %890
          %v893 = vmul.f32 %v881, %v886
          %v894 = vmul.f32 %v882, %v891
          %vm895 = vcmask 261120
          %896 = vst.msk [vmem:[%s307] sm:$0xff] %vm895, %v893
          %898 = vrot.lane.b32.xlu0 %v894, 32
          %v899 = vpop.permute.xlu0 %898
          %vm901 = vcmask 523520
          %902 = vst.msk [vmem:[%s307] sm:$0xff] %vm901, %v899
        $region60: #{tpu_custom_call.1} parent=31 // pred_fallthru
          _
        %s903 = sand.u32 %s144, 1
        %s904 = scalar_lea.sflag [#allocation8], %s903
        %s905 = sand.u32 %s144, 1
        %s906 = smul.addr %s905, 8
        %s907 = scalar_lea.vmem [#allocation12], %s906
        // Predicated region
        $region61: #{tpu_custom_call.1} parent=31 // pred_check
          %p908 = pneg %p154
        $region62: #{tpu_custom_call.1} parent=31 // pred_check_branch
          %910 = sbr.rel (%p908) target = $region64
        $region63: #{tpu_custom_call.1} parent=31 // pred_region
          %s912 = ssub.s32 128, 128
          %913 = vsyncadd %s904, %s912
          %s914 = sadd.s32 %s29, %s28
          %s915 = smul.addr %s914, 128
          %s916 = scalar_lea.hbm %s3, %s915
          %s918 = sshll.u32 %s907, 4
          %s919 = int_to_ptr.vmem [resolvable:$true] %s918
          %921 = dma.vmem_to_hbm [thread:$0]  %s919, 128, %s916, %s904
        $region64: #{tpu_custom_call.1} parent=31 // pred_fallthru
          _
      $region32: #{tpu_custom_call.1} parent=5 // pred_fallthru
        _
      %p922 = scmp.le.s32.totalorder 2, %s18
      // Predicated region
      $region65: #{tpu_custom_call.1} parent=5 // pred_check
        %p923 = pneg %p922
      $region66: #{tpu_custom_call.1} parent=5 // pred_check_branch
        %925 = sbr.rel (%p923) target = $region68
      $region67: #{tpu_custom_call.1} parent=5 // pred_region
        %s926 = ssub.s32 %s18, 2
        // Predicated region
        $region69: #{tpu_custom_call.1} parent=67 // pred_check
          %p927 = pneg %p160
        $region70: #{tpu_custom_call.1} parent=67 // pred_check_branch
          %929 = sbr.rel (%p927) target = $region72
        $region71: #{tpu_custom_call.1} parent=67 // pred_region
          %s930 = sand.u32 %s145, 1
          %s931 = scalar_lea.sflag [#allocation8], %s930
          %s932 = sand.u32 %s145, 1
          %s933 = smul.addr %s932, 8
          %s934 = scalar_lea.vmem [#allocation12], %s933
          %935 = dma.done %s931, 128
        $region72: #{tpu_custom_call.1} parent=67 // pred_fallthru
          _
      $region68: #{tpu_custom_call.1} parent=5 // pred_fallthru
        _
    $region6: #{tpu_custom_call.1} parent=1 // loop_footer
      %s22 = sadd.s32 1, %s18
    $region7: #{tpu_custom_call.1} parent=1 // loop_footer_branch
      %17 = sbr.rel target = $region3
    $region8: #{tpu_custom_call.1} parent=1 // loop_exit
      _
    %936 = vsyncpa [#allocation7], 1
    %s937 = scalar_lea.sflag [#allocation7], 1
    %938 = vsyncpa %s937, 1
    %939 = vsyncpa [#allocation10], 1
    %s940 = scalar_lea.sflag [#allocation10], 1
    %941 = vsyncpa %s940, 1
    %942 = vsyncpa [#allocation8], 1
    %s943 = scalar_lea.sflag [#allocation8], 1
    %944 = vsyncpa %s943, 1

</llo_original>
